<compile_context>
chip_gen: v5e
topology: v5e:2x2
jax: 0.10.0
libtpu: 0.0.40
codegen_flags: <defaults>
</compile_context>

<pallas_src>
import functools

import jax
import jax.numpy as jnp
from jax.experimental import pallas as pl
from jax.experimental.pallas import tpu as pltpu

_LANE = 128      # last-dim (lane) granularity
_SUBLANE = 8     # second-to-last dim granularity


def _round_up(x, m):
    return (x + m - 1) // m * m


def _vmem_limit_bytes():
    """Per-generation VMEM budget (v7x: 64 MiB/TC, v5e/v6e: 128 MiB)."""
    try:
        cap = pltpu.get_tpu_info().vmem_capacity_bytes
        return int(cap * 3 // 4)
    except Exception:
        return 32 << 20


def _make_mlp_kernel(num_layers, compute_dtype):
    """Kernel over one batch tile: chains all layers with the activation kept in VMEM/vregs."""

    def kernel(*refs):
        # refs = (x, w0, b0, w1, b1, ..., w_{L-1}, b_{L-1}, out)
        x_ref = refs[0]
        o_ref = refs[1 + 2 * num_layers]
        h = x_ref[...]                                   # (TM, K0_pad), compute_dtype
        # Static unroll: layer count is small and fixed at trace time.
        # (For very large hidden dims, this would become a K-tiled accumulator loop; the
        #  resident (K_pad, N_pad) weight blocks here are fine for the sizes this MLP uses.)
        for i in range(num_layers):
            w_ref = refs[1 + 2 * i]
            b_ref = refs[2 + 2 * i]
            y = jnp.dot(h, w_ref[...], preferred_element_type=jnp.float32)  # MXU, f32 acc
            y = y + b_ref[...]                           # (1, N_pad) broadcasts over batch tile
            if i < num_layers - 1:
                h = jnp.maximum(y, 0.0).astype(compute_dtype)
            else:
                o_ref[...] = y.astype(o_ref.dtype)

    return kernel


def mlp_forward(x, params, *, compute_dtype=jnp.float32, tm=128):
    """Fused MLP forward.

    x: (B, in_size) f32.
    params: list of (W, b) with W: (fan_in, fan_out), b: (fan_out,), both f32 (unpadded).
    compute_dtype: dtype fed to the MXU (jnp.float32 or jnp.bfloat16); accumulation is f32.
    """
    B, in_size = x.shape
    num_layers = len(params)
    out_size = params[-1][0].shape[1]

    # Lane-dense padding of every feature dim to a multiple of 128.
    dims = [in_size] + [w.shape[1] for (w, _) in params]
    dims_pad = [_round_up(d, _LANE) for d in dims]

    # Batch tile: multiple of 8 sublanes, capped at `tm`.
    tm = min(tm, _round_up(B, _SUBLANE))
    b_pad = _round_up(B, tm)

    x_p = jnp.pad(x, ((0, b_pad - B), (0, dims_pad[0] - in_size))).astype(compute_dtype)

    flat_args = [x_p]
    in_specs = [pl.BlockSpec((tm, dims_pad[0]), lambda i: (i, 0))]
    for li, (w, b) in enumerate(params):
        k, n = w.shape
        w_p = jnp.pad(w, ((0, dims_pad[li] - k), (0, dims_pad[li + 1] - n))).astype(compute_dtype)
        b_p = jnp.pad(b.reshape(1, n), ((0, 0), (0, dims_pad[li + 1] - n))).astype(jnp.float32)
        flat_args += [w_p, b_p]
        # Weights/bias stay resident across the batch grid (same block for every step).
        in_specs.append(pl.BlockSpec(w_p.shape, lambda i: (0, 0)))
        in_specs.append(pl.BlockSpec(b_p.shape, lambda i: (0, 0)))

    out_p = pl.pallas_call(
        _make_mlp_kernel(num_layers, compute_dtype),
        out_shape=jax.ShapeDtypeStruct((b_pad, dims_pad[-1]), jnp.float32),
        grid=(b_pad // tm,),
        in_specs=in_specs,
        out_specs=pl.BlockSpec((tm, dims_pad[-1]), lambda i: (i, 0)),
        compiler_params=pltpu.CompilerParams(
            dimension_semantics=("parallel",),
            vmem_limit_bytes=_vmem_limit_bytes(),
        ),
    )(*flat_args)

    return out_p[:B, :out_size]


def init_mlp_params(key, in_size, hidden_dim, out_size, num_layers):
    """Deterministic init matching nn.Linear's U(-1/sqrt(fan_in), 1/sqrt(fan_in)).

    Returns num_layers + 1 (W, b) pairs: Linear(in,h), [Linear(h,h)]*(num_layers-1), Linear(h,out).
    """
    sizes = [in_size] + [hidden_dim] * num_layers + [out_size]
    params = []
    for i in range(len(sizes) - 1):
        fan_in, fan_out = sizes[i], sizes[i + 1]
        key, kw, kb = jax.random.split(key, 3)
        bound = 1.0 / jnp.sqrt(fan_in)
        w = jax.random.uniform(kw, (fan_in, fan_out), jnp.float32, -bound, bound)
        b = jax.random.uniform(kb, (fan_out,), jnp.float32, -bound, bound)
        params.append((w, b))
    return params


if __name__ == "__main__":
    in_size, hidden_dim, out_size, num_layers = 16, 32, 8, 3
    batch = 8

    key = jax.random.PRNGKey(0)
    key, kx = jax.random.split(key)
    x = jax.random.normal(kx, (batch, in_size), jnp.float32)
    params = init_mlp_params(key, in_size, hidden_dim, out_size, num_layers)

    # --- f32 MXU path: tight correctness check against pure-JAX reference ---
    fwd_f32 = jax.jit(functools.partial(mlp_forward, compute_dtype=jnp.float32))
    out = fwd_f32(x, params)
    jax.block_until_ready(out)

    ref = x
    for i, (w, b) in enumerate(params):
        ref = ref @ w + b
        if i < len(params) - 1:
            ref = jnp.maximum(ref, 0.0)
    assert out.shape == (batch, out_size)
    assert jnp.allclose(out, ref, atol=1e-5, rtol=1e-5)

    # --- bf16 MXU path (v6e/v7x fast path): check against a bf16-consistent reference ---
    fwd_bf16 = jax.jit(functools.partial(mlp_forward, compute_dtype=jnp.bfloat16))
    out_bf16 = fwd_bf16(x, params)
    jax.block_until_ready(out_bf16)

    h16 = x.astype(jnp.bfloat16)
    for i, (w, b) in enumerate(params):
        y = jnp.dot(h16, w.astype(jnp.bfloat16), preferred_element_type=jnp.float32) + b
        if i < len(params) - 1:
            h16 = jnp.maximum(y, 0.0).astype(jnp.bfloat16)
        else:
            h16 = y
    assert out_bf16.shape == (batch, out_size)
    assert jnp.allclose(out_bf16, h16, atol=2e-2, rtol=2e-2)

    print("KERNEL_OK")
</pallas_src>

<mosaic_0001>
module attributes {stable_mosaic.version = 11 : i64} {
  func.func @kernel(%arg0: i32, %arg1: memref<8x128xf32, #tpu.memory_space<vmem>>, %arg2: memref<128x128xf32, #tpu.memory_space<vmem>>, %arg3: memref<1x128xf32, #tpu.memory_space<vmem>>, %arg4: memref<128x128xf32, #tpu.memory_space<vmem>>, %arg5: memref<1x128xf32, #tpu.memory_space<vmem>>, %arg6: memref<128x128xf32, #tpu.memory_space<vmem>>, %arg7: memref<1x128xf32, #tpu.memory_space<vmem>>, %arg8: memref<128x128xf32, #tpu.memory_space<vmem>>, %arg9: memref<1x128xf32, #tpu.memory_space<vmem>>, %arg10: memref<8x128xf32, #tpu.memory_space<vmem>>) attributes {dimension_semantics = [#tpu.dimension_semantics<parallel>], iteration_bounds = array<i64: 1>, scalar_prefetch = 0 : i64, scratch_operands = 0 : i64, tpu.core_type = #tpu.core_type<tc>, window_params = [{transform_indices = @transform_0, window_bounds = array<i64: 8, 128>}, {pipeline_mode = #tpu.pipeline_mode<synchronous>, transform_indices = @transform_1, window_bounds = array<i64: 128, 128>}, {pipeline_mode = #tpu.pipeline_mode<synchronous>, transform_indices = @transform_2, window_bounds = array<i64: 1, 128>}, {pipeline_mode = #tpu.pipeline_mode<synchronous>, transform_indices = @transform_3, window_bounds = array<i64: 128, 128>}, {pipeline_mode = #tpu.pipeline_mode<synchronous>, transform_indices = @transform_4, window_bounds = array<i64: 1, 128>}, {pipeline_mode = #tpu.pipeline_mode<synchronous>, transform_indices = @transform_5, window_bounds = array<i64: 128, 128>}, {pipeline_mode = #tpu.pipeline_mode<synchronous>, transform_indices = @transform_6, window_bounds = array<i64: 1, 128>}, {pipeline_mode = #tpu.pipeline_mode<synchronous>, transform_indices = @transform_7, window_bounds = array<i64: 128, 128>}, {pipeline_mode = #tpu.pipeline_mode<synchronous>, transform_indices = @transform_8, window_bounds = array<i64: 1, 128>}, {transform_indices = @transform_9, window_bounds = array<i64: 8, 128>}]} {
    %c0 = arith.constant 0 : index
    %c0_0 = arith.constant 0 : index
    %0 = vector.load %arg1[%c0, %c0_0] : memref<8x128xf32, #tpu.memory_space<vmem>>, vector<8x128xf32>
    %c0_1 = arith.constant 0 : index
    %c0_2 = arith.constant 0 : index
    %1 = vector.load %arg2[%c0_1, %c0_2] : memref<128x128xf32, #tpu.memory_space<vmem>>, vector<128x128xf32>
    %cst = arith.constant dense<0.000000e+00> : vector<8x128xf32>
    %2 = tpu.matmul %0, %1, %cst {dimension_numbers = #tpu.dot_dimension_numbers<[1], [0], [0], [1], [0, 0, 1, 1], [], []>} : vector<8x128xf32>, vector<128x128xf32>, vector<8x128xf32> -> vector<8x128xf32>
    %c0_3 = arith.constant 0 : index
    %c0_4 = arith.constant 0 : index
    %3 = vector.load %arg3[%c0_3, %c0_4] : memref<1x128xf32, #tpu.memory_space<vmem>>, vector<1x128xf32>
    %4 = vector.broadcast %3 : vector<1x128xf32> to vector<8x128xf32>
    %5 = arith.addf %2, %4 : vector<8x128xf32>
    %cst_5 = arith.constant 0.000000e+00 : f32
    %6 = vector.broadcast %cst_5 : f32 to vector<8x128xf32>
    %7 = arith.maximumf %5, %6 : vector<8x128xf32>
    %c0_6 = arith.constant 0 : index
    %c0_7 = arith.constant 0 : index
    %8 = vector.load %arg4[%c0_6, %c0_7] : memref<128x128xf32, #tpu.memory_space<vmem>>, vector<128x128xf32>
    %cst_8 = arith.constant dense<0.000000e+00> : vector<8x128xf32>
    %9 = tpu.matmul %7, %8, %cst_8 {dimension_numbers = #tpu.dot_dimension_numbers<[1], [0], [0], [1], [0, 0, 1, 1], [], []>} : vector<8x128xf32>, vector<128x128xf32>, vector<8x128xf32> -> vector<8x128xf32>
    %c0_9 = arith.constant 0 : index
    %c0_10 = arith.constant 0 : index
    %10 = vector.load %arg5[%c0_9, %c0_10] : memref<1x128xf32, #tpu.memory_space<vmem>>, vector<1x128xf32>
    %11 = vector.broadcast %10 : vector<1x128xf32> to vector<8x128xf32>
    %12 = arith.addf %9, %11 : vector<8x128xf32>
    %cst_11 = arith.constant 0.000000e+00 : f32
    %13 = vector.broadcast %cst_11 : f32 to vector<8x128xf32>
    %14 = arith.maximumf %12, %13 : vector<8x128xf32>
    %c0_12 = arith.constant 0 : index
    %c0_13 = arith.constant 0 : index
    %15 = vector.load %arg6[%c0_12, %c0_13] : memref<128x128xf32, #tpu.memory_space<vmem>>, vector<128x128xf32>
    %cst_14 = arith.constant dense<0.000000e+00> : vector<8x128xf32>
    %16 = tpu.matmul %14, %15, %cst_14 {dimension_numbers = #tpu.dot_dimension_numbers<[1], [0], [0], [1], [0, 0, 1, 1], [], []>} : vector<8x128xf32>, vector<128x128xf32>, vector<8x128xf32> -> vector<8x128xf32>
    %c0_15 = arith.constant 0 : index
    %c0_16 = arith.constant 0 : index
    %17 = vector.load %arg7[%c0_15, %c0_16] : memref<1x128xf32, #tpu.memory_space<vmem>>, vector<1x128xf32>
    %18 = vector.broadcast %17 : vector<1x128xf32> to vector<8x128xf32>
    %19 = arith.addf %16, %18 : vector<8x128xf32>
    %cst_17 = arith.constant 0.000000e+00 : f32
    %20 = vector.broadcast %cst_17 : f32 to vector<8x128xf32>
    %21 = arith.maximumf %19, %20 : vector<8x128xf32>
    %c0_18 = arith.constant 0 : index
    %c0_19 = arith.constant 0 : index
    %22 = vector.load %arg8[%c0_18, %c0_19] : memref<128x128xf32, #tpu.memory_space<vmem>>, vector<128x128xf32>
    %cst_20 = arith.constant dense<0.000000e+00> : vector<8x128xf32>
    %23 = tpu.matmul %21, %22, %cst_20 {dimension_numbers = #tpu.dot_dimension_numbers<[1], [0], [0], [1], [0, 0, 1, 1], [], []>} : vector<8x128xf32>, vector<128x128xf32>, vector<8x128xf32> -> vector<8x128xf32>
    %c0_21 = arith.constant 0 : index
    %c0_22 = arith.constant 0 : index
    %24 = vector.load %arg9[%c0_21, %c0_22] : memref<1x128xf32, #tpu.memory_space<vmem>>, vector<1x128xf32>
    %25 = vector.broadcast %24 : vector<1x128xf32> to vector<8x128xf32>
    %26 = arith.addf %23, %25 : vector<8x128xf32>
    %c0_23 = arith.constant 0 : index
    %c0_24 = arith.constant 0 : index
    %27 = vector.load %arg10[%c0_23, %c0_24] : memref<8x128xf32, #tpu.memory_space<vmem>>, vector<8x128xf32>
    tpu.vector_store %arg10[%c0_23, %c0_24], %26 {strides = array<i32>} : memref<8x128xf32, #tpu.memory_space<vmem>>, vector<8x128xf32>,
    return
  }
  func.func @transform_0(%arg0: i32) -> (i32, i32) {
    %c0_i32 = arith.constant 0 : i32
    %c0_i32_0 = arith.constant 0 : i32
    return %arg0, %c0_i32 : i32, i32
  }
  func.func @transform_1(%arg0: i32) -> (i32, i32) {
    %c0_i32 = arith.constant 0 : i32
    %c0_i32_0 = arith.constant 0 : i32
    %c0_i32_1 = arith.constant 0 : i32
    return %c0_i32, %c0_i32_0 : i32, i32
  }
  func.func @transform_2(%arg0: i32) -> (i32, i32) {
    %c0_i32 = arith.constant 0 : i32
    %c0_i32_0 = arith.constant 0 : i32
    %c0_i32_1 = arith.constant 0 : i32
    return %c0_i32, %c0_i32_0 : i32, i32
  }
  func.func @transform_3(%arg0: i32) -> (i32, i32) {
    %c0_i32 = arith.constant 0 : i32
    %c0_i32_0 = arith.constant 0 : i32
    %c0_i32_1 = arith.constant 0 : i32
    return %c0_i32, %c0_i32_0 : i32, i32
  }
  func.func @transform_4(%arg0: i32) -> (i32, i32) {
    %c0_i32 = arith.constant 0 : i32
    %c0_i32_0 = arith.constant 0 : i32
    %c0_i32_1 = arith.constant 0 : i32
    return %c0_i32, %c0_i32_0 : i32, i32
  }
  func.func @transform_5(%arg0: i32) -> (i32, i32) {
    %c0_i32 = arith.constant 0 : i32
    %c0_i32_0 = arith.constant 0 : i32
    %c0_i32_1 = arith.constant 0 : i32
    return %c0_i32, %c0_i32_0 : i32, i32
  }
  func.func @transform_6(%arg0: i32) -> (i32, i32) {
    %c0_i32 = arith.constant 0 : i32
    %c0_i32_0 = arith.constant 0 : i32
    %c0_i32_1 = arith.constant 0 : i32
    return %c0_i32, %c0_i32_0 : i32, i32
  }
  func.func @transform_7(%arg0: i32) -> (i32, i32) {
    %c0_i32 = arith.constant 0 : i32
    %c0_i32_0 = arith.constant 0 : i32
    %c0_i32_1 = arith.constant 0 : i32
    return %c0_i32, %c0_i32_0 : i32, i32
  }
  func.func @transform_8(%arg0: i32) -> (i32, i32) {
    %c0_i32 = arith.constant 0 : i32
    %c0_i32_0 = arith.constant 0 : i32
    %c0_i32_1 = arith.constant 0 : i32
    return %c0_i32, %c0_i32_0 : i32, i32
  }
  func.func @transform_9(%arg0: i32) -> (i32, i32) {
    %c0_i32 = arith.constant 0 : i32
    %c0_i32_0 = arith.constant 0 : i32
    return %arg0, %c0_i32 : i32, i32
  }
}

</mosaic_0001>

<llo_original>
// kernel: mlp_forward.1
$region0: #{mlp_forward.1}
  #allocation0 [shape = 'u32[]', space=smem, size = 0x4, offset = 0x4, fixed_abs, tag = 'smem constant byte address 0x4 - core index']
  #allocation1 [shape = 'u32[72,128]{1,0:T(1,128)}', space=vmem, size = 0x9000, scoped, tag = 'internal scratch']
  %s0 = inlined_call_operand.vmem [shape: f32[8,128], index: 0, kind: input, shape index: {}]
  %s1 = inlined_call_operand.vmem [shape: f32[128,128], index: 1, kind: input, shape index: {}]
  %s2 = inlined_call_operand.vmem [shape: f32[1,128], index: 2, kind: input, shape index: {}]
  %s3 = inlined_call_operand.vmem [shape: f32[128,128], index: 3, kind: input, shape index: {}]
  %s4 = inlined_call_operand.vmem [shape: f32[1,128], index: 4, kind: input, shape index: {}]
  %s5 = inlined_call_operand.vmem [shape: f32[128,128], index: 5, kind: input, shape index: {}]
  %s6 = inlined_call_operand.vmem [shape: f32[1,128], index: 6, kind: input, shape index: {}]
  %s7 = inlined_call_operand.vmem [shape: f32[128,128], index: 7, kind: input, shape index: {}]
  %s8 = inlined_call_operand.vmem [shape: f32[1,128], index: 8, kind: input, shape index: {}]
  %s9 = inlined_call_operand.hbm [shape: f32[8,128], index: 9, kind: output, shape index: {}]
  %s10 = sld [smem:[#allocation0]]
  $region46: #{mlp_forward.1} parent=0
    _
  %s12 = ssub.s32 1, %s10
  %s13 = scalar_select 0, %s12, %s10
  $region1: #{mlp_forward.1} parent=0
    #allocation2 [shape = 'u8[4096]{0}', space=vmem, size = 0x1000, scoped, tag = 'output window, operand 0, single buffered']
    #allocation3 [shape = 's32[1]{0}', space=sflag, size = 0x4, scoped, tag = 'scoped memory for mlp_forward.1']
    %14 = vsyncpa [#allocation3], 0
    // Predicated region
    $region2: #{mlp_forward.1} parent=1 // pred_check
      _
    $region3: #{mlp_forward.1} parent=1 // pred_check_branch
      %16 = sbr.rel (0) target = $region5
    $region4: #{mlp_forward.1} parent=1 // pred_region
      _
    $region5: #{mlp_forward.1} parent=1 // pred_fallthru
      _
    // Predicated region
    $region6: #{mlp_forward.1} parent=1 // pred_check
      _
    $region7: #{mlp_forward.1} parent=1 // pred_check_branch
      %18 = sbr.rel (0) target = $region9
    $region8: #{mlp_forward.1} parent=1 // pred_region
      _
    $region9: #{mlp_forward.1} parent=1 // pred_fallthru
      _
    // Predicated region
    $region10: #{mlp_forward.1} parent=1 // pred_check
      _
    $region11: #{mlp_forward.1} parent=1 // pred_check_branch
      %20 = sbr.rel (0) target = $region13
    $region12: #{mlp_forward.1} parent=1 // pred_region
      _
    $region13: #{mlp_forward.1} parent=1 // pred_fallthru
      _
    // Predicated region
    $region14: #{mlp_forward.1} parent=1 // pred_check
      _
    $region15: #{mlp_forward.1} parent=1 // pred_check_branch
      %22 = sbr.rel (0) target = $region17
    $region16: #{mlp_forward.1} parent=1 // pred_region
      _
    $region17: #{mlp_forward.1} parent=1 // pred_fallthru
      _
    // Predicated region
    $region18: #{mlp_forward.1} parent=1 // pred_check
      _
    $region19: #{mlp_forward.1} parent=1 // pred_check_branch
      %24 = sbr.rel (0) target = $region21
    $region20: #{mlp_forward.1} parent=1 // pred_region
      _
    $region21: #{mlp_forward.1} parent=1 // pred_fallthru
      _
    // Predicated region
    $region22: #{mlp_forward.1} parent=1 // pred_check
      _
    $region23: #{mlp_forward.1} parent=1 // pred_check_branch
      %26 = sbr.rel (0) target = $region25
    $region24: #{mlp_forward.1} parent=1 // pred_region
      _
    $region25: #{mlp_forward.1} parent=1 // pred_fallthru
      _
    // Predicated region
    $region26: #{mlp_forward.1} parent=1 // pred_check
      _
    $region27: #{mlp_forward.1} parent=1 // pred_check_branch
      %28 = sbr.rel (0) target = $region29
    $region28: #{mlp_forward.1} parent=1 // pred_region
      _
    $region29: #{mlp_forward.1} parent=1 // pred_fallthru
      _
    // Predicated region
    $region30: #{mlp_forward.1} parent=1 // pred_check
      _
    $region31: #{mlp_forward.1} parent=1 // pred_check_branch
      %30 = sbr.rel (0) target = $region33
    $region32: #{mlp_forward.1} parent=1 // pred_region
      _
    $region33: #{mlp_forward.1} parent=1 // pred_fallthru
      _
    // Predicated region
    $region34: #{mlp_forward.1} parent=1 // pred_check
      _
    $region35: #{mlp_forward.1} parent=1 // pred_check_branch
      %32 = sbr.rel (0) target = $region37
    $region36: #{mlp_forward.1} parent=1 // pred_region
      _
    $region37: #{mlp_forward.1} parent=1 // pred_fallthru
      _
    %v33 = vld [vmem:[%s0] sm:$0xff]
    %v34 = vld [vmem:[%s1] sm:$0xff]
    %v35 = vld [vmem:[%s1 + $0x8] sm:$0xff]
    %v36 = vld [vmem:[%s1 + $0x10] sm:$0xff]
    %v37 = vld [vmem:[%s1 + $0x18] sm:$0xff]
    %v38 = vld [vmem:[%s1 + $0x20] sm:$0xff]
    %v39 = vld [vmem:[%s1 + $0x28] sm:$0xff]
    %v40 = vld [vmem:[%s1 + $0x30] sm:$0xff]
    %v41 = vld [vmem:[%s1 + $0x38] sm:$0xff]
    %v42 = vld [vmem:[%s1 + $0x40] sm:$0xff]
    %v43 = vld [vmem:[%s1 + $0x48] sm:$0xff]
    %v44 = vld [vmem:[%s1 + $0x50] sm:$0xff]
    %v45 = vld [vmem:[%s1 + $0x58] sm:$0xff]
    %v46 = vld [vmem:[%s1 + $0x60] sm:$0xff]
    %v47 = vld [vmem:[%s1 + $0x68] sm:$0xff]
    %v48 = vld [vmem:[%s1 + $0x70] sm:$0xff]
    %v49 = vld [vmem:[%s1 + $0x78] sm:$0xff]
    %v50 = vld [vmem:[%s2] sm:$0x1]
    %v52 = vperm.slane %v50, 0
    %54 = vmatpush.msra.mxu0 %v49
    %55 = vmatpush.msra.mxu0 %v48
    %56 = vmatpush.msra.mxu0 %v47
    %57 = vmatpush.msra.mxu0 %v46
    %58 = vmatpush.msra.mxu0 %v45
    %59 = vmatpush.msra.mxu0 %v44
    %60 = vmatpush.msra.mxu0 %v43
    %61 = vmatpush.msra.mxu0 %v42
    %62 = vmatpush.msra.mxu0 %v41
    %63 = vmatpush.msra.mxu0 %v40
    %64 = vmatpush.msra.mxu0 %v39
    %65 = vmatpush.msra.mxu0 %v38
    %66 = vmatpush.msra.mxu0 %v37
    %67 = vmatpush.msra.mxu0 %v36
    %68 = vmatpush.msra.mxu0 %v35
    %69 = vmatpush.msra.mxu0 %v34
    %70 = vmatmul.f32.gmra.mxu0 %v33
    %v71 = vpop.f32.mrf.mxu0
    %v72 = vadd.f32 %v52, %v71
    %73 = vdwg.mxu0
    %v74 = vmax.f32 %v72, 0.0
    %v75 = vld [vmem:[%s3] sm:$0xff]
    %v76 = vld [vmem:[%s3 + $0x8] sm:$0xff]
    %v77 = vld [vmem:[%s3 + $0x10] sm:$0xff]
    %v78 = vld [vmem:[%s3 + $0x18] sm:$0xff]
    %v79 = vld [vmem:[%s3 + $0x20] sm:$0xff]
    %v80 = vld [vmem:[%s3 + $0x28] sm:$0xff]
    %v81 = vld [vmem:[%s3 + $0x30] sm:$0xff]
    %v82 = vld [vmem:[%s3 + $0x38] sm:$0xff]
    %v83 = vld [vmem:[%s3 + $0x40] sm:$0xff]
    %v84 = vld [vmem:[%s3 + $0x48] sm:$0xff]
    %v85 = vld [vmem:[%s3 + $0x50] sm:$0xff]
    %v86 = vld [vmem:[%s3 + $0x58] sm:$0xff]
    %v87 = vld [vmem:[%s3 + $0x60] sm:$0xff]
    %v88 = vld [vmem:[%s3 + $0x68] sm:$0xff]
    %v89 = vld [vmem:[%s3 + $0x70] sm:$0xff]
    %v90 = vld [vmem:[%s3 + $0x78] sm:$0xff]
    %v91 = vld [vmem:[%s4] sm:$0x1]
    %v93 = vperm.slane %v91, 0
    %95 = vmatpush.msra.mxu0 %v90
    %96 = vmatpush.msra.mxu0 %v89
    %97 = vmatpush.msra.mxu0 %v88
    %98 = vmatpush.msra.mxu0 %v87
    %99 = vmatpush.msra.mxu0 %v86
    %100 = vmatpush.msra.mxu0 %v85
    %101 = vmatpush.msra.mxu0 %v84
    %102 = vmatpush.msra.mxu0 %v83
    %103 = vmatpush.msra.mxu0 %v82
    %104 = vmatpush.msra.mxu0 %v81
    %105 = vmatpush.msra.mxu0 %v80
    %106 = vmatpush.msra.mxu0 %v79
    %107 = vmatpush.msra.mxu0 %v78
    %108 = vmatpush.msra.mxu0 %v77
    %109 = vmatpush.msra.mxu0 %v76
    %110 = vmatpush.msra.mxu0 %v75
    %111 = vmatmul.f32.gmra.mxu0 %v74
    %v112 = vpop.f32.mrf.mxu0
    %v113 = vadd.f32 %v93, %v112
    %114 = vdwg.mxu0
    %v115 = vmax.f32 %v113, 0.0
    %v116 = vld [vmem:[%s5] sm:$0xff]
    %v117 = vld [vmem:[%s5 + $0x8] sm:$0xff]
    %v118 = vld [vmem:[%s5 + $0x10] sm:$0xff]
    %v119 = vld [vmem:[%s5 + $0x18] sm:$0xff]
    %v120 = vld [vmem:[%s5 + $0x20] sm:$0xff]
    %v121 = vld [vmem:[%s5 + $0x28] sm:$0xff]
    %v122 = vld [vmem:[%s5 + $0x30] sm:$0xff]
    %v123 = vld [vmem:[%s5 + $0x38] sm:$0xff]
    %v124 = vld [vmem:[%s5 + $0x40] sm:$0xff]
    %v125 = vld [vmem:[%s5 + $0x48] sm:$0xff]
    %v126 = vld [vmem:[%s5 + $0x50] sm:$0xff]
    %v127 = vld [vmem:[%s5 + $0x58] sm:$0xff]
    %v128 = vld [vmem:[%s5 + $0x60] sm:$0xff]
    %v129 = vld [vmem:[%s5 + $0x68] sm:$0xff]
    %v130 = vld [vmem:[%s5 + $0x70] sm:$0xff]
    %v131 = vld [vmem:[%s5 + $0x78] sm:$0xff]
    %v132 = vld [vmem:[%s6] sm:$0x1]
    %v134 = vperm.slane %v132, 0
    %136 = vmatpush.msra.mxu0 %v131
    %137 = vmatpush.msra.mxu0 %v130
    %138 = vmatpush.msra.mxu0 %v129
    %139 = vmatpush.msra.mxu0 %v128
    %140 = vmatpush.msra.mxu0 %v127
    %141 = vmatpush.msra.mxu0 %v126
    %142 = vmatpush.msra.mxu0 %v125
    %143 = vmatpush.msra.mxu0 %v124
    %144 = vmatpush.msra.mxu0 %v123
    %145 = vmatpush.msra.mxu0 %v122
    %146 = vmatpush.msra.mxu0 %v121
    %147 = vmatpush.msra.mxu0 %v120
    %148 = vmatpush.msra.mxu0 %v119
    %149 = vmatpush.msra.mxu0 %v118
    %150 = vmatpush.msra.mxu0 %v117
    %151 = vmatpush.msra.mxu0 %v116
    %152 = vmatmul.f32.gmra.mxu0 %v115
    %v153 = vpop.f32.mrf.mxu0
    %v154 = vadd.f32 %v134, %v153
    %155 = vdwg.mxu0
    %v156 = vmax.f32 %v154, 0.0
    %v157 = vld [vmem:[%s7] sm:$0xff]
    %v158 = vld [vmem:[%s7 + $0x8] sm:$0xff]
    %v159 = vld [vmem:[%s7 + $0x10] sm:$0xff]
    %v160 = vld [vmem:[%s7 + $0x18] sm:$0xff]
    %v161 = vld [vmem:[%s7 + $0x20] sm:$0xff]
    %v162 = vld [vmem:[%s7 + $0x28] sm:$0xff]
    %v163 = vld [vmem:[%s7 + $0x30] sm:$0xff]
    %v164 = vld [vmem:[%s7 + $0x38] sm:$0xff]
    %v165 = vld [vmem:[%s7 + $0x40] sm:$0xff]
    %v166 = vld [vmem:[%s7 + $0x48] sm:$0xff]
    %v167 = vld [vmem:[%s7 + $0x50] sm:$0xff]
    %v168 = vld [vmem:[%s7 + $0x58] sm:$0xff]
    %v169 = vld [vmem:[%s7 + $0x60] sm:$0xff]
    %v170 = vld [vmem:[%s7 + $0x68] sm:$0xff]
    %v171 = vld [vmem:[%s7 + $0x70] sm:$0xff]
    %v172 = vld [vmem:[%s7 + $0x78] sm:$0xff]
    %v173 = vld [vmem:[%s8] sm:$0x1]
    %v175 = vperm.slane %v173, 0
    %177 = vmatpush.msra.mxu0 %v172
    %178 = vmatpush.msra.mxu0 %v171
    %179 = vmatpush.msra.mxu0 %v170
    %180 = vmatpush.msra.mxu0 %v169
    %181 = vmatpush.msra.mxu0 %v168
    %182 = vmatpush.msra.mxu0 %v167
    %183 = vmatpush.msra.mxu0 %v166
    %184 = vmatpush.msra.mxu0 %v165
    %185 = vmatpush.msra.mxu0 %v164
    %186 = vmatpush.msra.mxu0 %v163
    %187 = vmatpush.msra.mxu0 %v162
    %188 = vmatpush.msra.mxu0 %v161
    %189 = vmatpush.msra.mxu0 %v160
    %190 = vmatpush.msra.mxu0 %v159
    %191 = vmatpush.msra.mxu0 %v158
    %192 = vmatpush.msra.mxu0 %v157
    %193 = vmatmul.f32.gmra.mxu0 %v156
    %v194 = vpop.f32.mrf.mxu0
    %v195 = vadd.f32 %v175, %v194
    %196 = vdwg.mxu0
    %197 = vst [vmem:[#allocation2] sm:$0xff] %v195
    // Predicated region
    $region38: #{mlp_forward.1} parent=1 // pred_check
      _
    $region39: #{mlp_forward.1} parent=1 // pred_check_branch
      %199 = sbr.rel (0) target = $region41
    $region40: #{mlp_forward.1} parent=1 // pred_region
      %201 = vsyncadd [#allocation3], 0
      %s203 = sshll.u32 [#allocation2], 4
      %s204 = int_to_ptr.vmem [resolvable:$true] %s203
      %s205 = sshll.u32 %s9, 4
      %s206 = int_to_ptr.hbm [resolvable:$true] %s205
      %208 = dma.vmem_to_hbm [thread:$0]  %s204, 128, %s206, [#allocation3]
    $region41: #{mlp_forward.1} parent=1 // pred_fallthru
      _
    // Predicated region
    $region42: #{mlp_forward.1} parent=1 // pred_check
      _
    $region43: #{mlp_forward.1} parent=1 // pred_check_branch
      %210 = sbr.rel (0) target = $region45
    $region44: #{mlp_forward.1} parent=1 // pred_region
      %212 = dma.done [#allocation3], 128
    $region45: #{mlp_forward.1} parent=1 // pred_fallthru
      _
    %213 = vsyncpa [#allocation3], 1

</llo_original>
